<compile_context>
chip_gen: v5e
topology: v5e:2x2
jax: 0.10.0
libtpu: 0.0.40
codegen_flags: <defaults>
</compile_context>

<pallas_src>
import functools

import jax
import jax.numpy as jnp
from jax import lax
from jax.experimental import pallas as pl
from jax.experimental.pallas import tpu as pltpu


FC1_DIMS = 256
FC2_DIMS = 256


def _round_up(x, m):
    return (x + m - 1) // m * m


def _ceil_div(a, b):
    return -(-a // b)


# ----------------------------------------------------------------------------
# Pallas kernel: fused Linear -> ReLU -> Linear -> ReLU -> Linear(., 1)
# ----------------------------------------------------------------------------
def _critic_mlp_kernel(x_ref, w1_ref, b1_ref, w2_ref, b2_ref, w3_ref, b3_ref,
                       out_ref, *, elementwise_bf16):
    act_dtype = jnp.bfloat16 if elementwise_bf16 else jnp.float32

    x = x_ref[...].astype(jnp.bfloat16)                          # (TB, D_in)

    # fc1: bf16 MXU matmul, f32 accumulation; bias + ReLU on the VPU
    # (bf16 on v6e/v7x which have bf16 VALUs, f32 on v5e).
    h1 = jnp.dot(x, w1_ref[...], preferred_element_type=jnp.float32)
    h1 = jnp.maximum(h1.astype(act_dtype) + b1_ref[...].astype(act_dtype), 0)

    # fc2
    h2 = jnp.dot(h1.astype(jnp.bfloat16), w2_ref[...],
                 preferred_element_type=jnp.float32)
    h2 = jnp.maximum(h2.astype(act_dtype) + b2_ref[...].astype(act_dtype), 0)

    # fc3 (value head, out_features == 1): contract the feature dims of the
    # (1, 256) weight row and h2 on the MXU.  The result is a lane-dense
    # (1, TB) row, so the writeback is an unmasked full-lane store.
    v = lax.dot_general(w3_ref[...], h2.astype(jnp.bfloat16),
                        dimension_numbers=(((1,), (1,)), ((), ())),
                        preferred_element_type=jnp.float32)      # (1, TB)
    out_ref[...] = (v + b3_ref[0, 0]).astype(out_ref.dtype)


# ----------------------------------------------------------------------------
# Wrapper
# ----------------------------------------------------------------------------
def _choose_tile(batch, tile_b, is_v7x):
    padded8 = _round_up(batch, 8)
    if padded8 <= 256:
        return padded8                                 # one small tile
    padded = _round_up(batch, 256)
    n_tiles = max(1, _ceil_div(padded, tile_b))
    if is_v7x and padded >= 512:
        n_tiles = max(n_tiles, 2)                      # keep both TCs busy
    return _round_up(_ceil_div(padded, n_tiles), 256)  # multiple of 256


def critic_forward(state, params, *, tile_b=None):
    """state: (B, input_dims) f32 or bf16 -> value: (B, 1) f32."""
    w1, b1, w2, b2, w3, b3 = params
    batch, d_in = state.shape

    kind = jax.devices()[0].device_kind.lower()
    is_v5 = "v5" in kind
    is_v7x = ("v7" in kind) or ("7x" in kind)
    # v6e/v7x VPUs have bf16 VALUs; on v5e bf16 elementwise only adds casts.
    elementwise_bf16 = not is_v5

    if tile_b is None:
        # v5e scoped VMEM default is 16 MiB (vs 32 MiB on v6e/v7x): cap there.
        tile_b = 1024 if is_v5 else 2048

    tb = _choose_tile(batch, tile_b, is_v7x)
    padded_b = _round_up(batch, tb)
    if padded_b != batch:
        state = jnp.pad(state, ((0, padded_b - batch), (0, 0)))
    grid = (padded_b // tb,)

    # Weights/biases: one full block whose index never changes across the
    # batch grid -> VMEM resident, no re-DMA after the first grid step.
    def resident(a):
        return pl.BlockSpec(a.shape, lambda i, _nd=a.ndim: (0,) * _nd)

    flops = 2 * padded_b * (d_in * FC1_DIMS + FC1_DIMS * FC2_DIMS + FC2_DIMS)
    bytes_accessed = (
        padded_b * d_in * state.dtype.itemsize          # state stream
        + (w1.size + w2.size + w3.size) * 2             # bf16 weights (once)
        + (b1.size + b2.size + b3.size) * 4             # f32 biases (once)
        + padded_b * 4)                                 # f32 output row

    kernel = functools.partial(_critic_mlp_kernel,
                               elementwise_bf16=elementwise_bf16)

    out = pl.pallas_call(
        kernel,
        out_shape=jax.ShapeDtypeStruct((1, padded_b), jnp.float32),
        grid=grid,
        in_specs=[
            pl.BlockSpec((tb, d_in), lambda i: (i, 0)),          # state tile
            resident(w1), resident(b1),                          # fc1
            resident(w2), resident(b2),                          # fc2
            resident(w3),                                        # fc3 row
            pl.BlockSpec(memory_space=pltpu.MemorySpace.SMEM),   # b3 scalar
        ],
        out_specs=pl.BlockSpec((1, tb), lambda i: (0, i)),       # lane-dense
        compiler_params=pltpu.CompilerParams(
            dimension_semantics=("parallel",)),
        cost_estimate=pl.CostEstimate(
            flops=flops, transcendentals=0, bytes_accessed=bytes_accessed),
    )(state, w1, b1, w2, b2, w3, b3)

    return jnp.reshape(out, (padded_b, 1))[:batch]


# ----------------------------------------------------------------------------
# Deterministic parameter init (mirrors nn.Linear default U(-1/sqrt(fan_in),.)).
# fc1/fc2 weights are stored transposed vs. PyTorch, i.e. (in, out), in bf16;
# fc3's weight is the native PyTorch (1, fc2) row, also bf16 (it contracts
# against h2's feature dim on the MXU).  Biases stay f32.
# ----------------------------------------------------------------------------
def init_params(key, input_dims, fc1_dims=FC1_DIMS, fc2_dims=FC2_DIMS):
    def linear(k, fan_in, fan_out):
        kw, kb = jax.random.split(k)
        bound = 1.0 / jnp.sqrt(jnp.float32(fan_in))
        w = jax.random.uniform(kw, (fan_in, fan_out), jnp.float32,
                               minval=-bound, maxval=bound)
        b = jax.random.uniform(kb, (1, fan_out), jnp.float32,
                               minval=-bound, maxval=bound)
        return w, b

    k1, k2, k3 = jax.random.split(key, 3)
    w1, b1 = linear(k1, input_dims, fc1_dims)
    w2, b2 = linear(k2, fc1_dims, fc2_dims)
    w3, b3 = linear(k3, fc2_dims, 1)
    return (w1.astype(jnp.bfloat16), b1,
            w2.astype(jnp.bfloat16), b2,
            w3.T.astype(jnp.bfloat16), b3)   # w3.T: (1, fc2) bf16; b3: (1, 1)


if __name__ == "__main__":
    key = jax.random.PRNGKey(0)
    k_param, k_s1, k_s2 = jax.random.split(key, 3)

    input_dims = 32
    params = init_params(k_param, input_dims)
    w1, b1, w2, b2, w3, b3 = params

    def ref_forward(s):
        h = jnp.maximum(s.astype(jnp.float32) @ w1.astype(jnp.float32) + b1, 0.0)
        h = jnp.maximum(h @ w2.astype(jnp.float32) + b2, 0.0)
        return h @ w3.astype(jnp.float32).T + b3

    # Small single-tile batch.
    s1 = jax.random.normal(k_s1, (8, input_dims), jnp.float32)
    v1 = jax.block_until_ready(critic_forward(s1, params))
    r1 = ref_forward(s1)
    assert v1.shape == (8, 1)
    assert jnp.allclose(v1, r1, atol=5e-2, rtol=5e-2), \
        float(jnp.max(jnp.abs(v1 - r1)))

    # Batch that exercises padding and the multiple-of-256 tile path.
    s2 = jax.random.normal(k_s2, (300, input_dims), jnp.float32)
    v2 = jax.block_until_ready(critic_forward(s2, params))
    r2 = ref_forward(s2)
    assert v2.shape == (300, 1)
    assert jnp.allclose(v2, r2, atol=5e-2, rtol=5e-2), \
        float(jnp.max(jnp.abs(v2 - r2)))

    print("KERNEL_OK")
</pallas_src>

<mosaic_0001>
module attributes {stable_mosaic.version = 11 : i64} {
  func.func @_critic_mlp_kernel(%arg0: i32, %arg1: memref<8x32xf32, #tpu.memory_space<vmem>>, %arg2: memref<32x256xbf16, #tpu.memory_space<vmem>>, %arg3: memref<1x256xf32, #tpu.memory_space<vmem>>, %arg4: memref<256x256xbf16, #tpu.memory_space<vmem>>, %arg5: memref<1x256xf32, #tpu.memory_space<vmem>>, %arg6: memref<1x256xbf16, #tpu.memory_space<vmem>>, %arg7: memref<1x1xf32, #tpu.memory_space<smem>>, %arg8: memref<1x8xf32, #tpu.memory_space<vmem>>) attributes {dimension_semantics = [#tpu.dimension_semantics<parallel>], iteration_bounds = array<i64: 1>, scalar_prefetch = 0 : i64, scratch_operands = 0 : i64, tpu.core_type = #tpu.core_type<tc>, window_params = [{transform_indices = @transform_0, window_bounds = array<i64: 8, 32>}, {pipeline_mode = #tpu.pipeline_mode<synchronous>, transform_indices = @transform_1, window_bounds = array<i64: 32, 256>}, {pipeline_mode = #tpu.pipeline_mode<synchronous>, transform_indices = @transform_2, window_bounds = array<i64: 1, 256>}, {pipeline_mode = #tpu.pipeline_mode<synchronous>, transform_indices = @transform_3, window_bounds = array<i64: 256, 256>}, {pipeline_mode = #tpu.pipeline_mode<synchronous>, transform_indices = @transform_4, window_bounds = array<i64: 1, 256>}, {pipeline_mode = #tpu.pipeline_mode<synchronous>, transform_indices = @transform_5, window_bounds = array<i64: 1, 256>}, {transform_indices = @transform_6, window_bounds = array<i64: 1, 1>}, {transform_indices = @transform_7, window_bounds = array<i64: 1, 8>}]} {
    %c0 = arith.constant 0 : index
    %c0_0 = arith.constant 0 : index
    %0 = vector.load %arg1[%c0, %c0_0] : memref<8x32xf32, #tpu.memory_space<vmem>>, vector<8x32xf32>
    %1 = arith.truncf %0 : vector<8x32xf32> to vector<8x32xbf16>
    %c0_1 = arith.constant 0 : index
    %c0_2 = arith.constant 0 : index
    %2 = vector.load %arg2[%c0_1, %c0_2] : memref<32x256xbf16, #tpu.memory_space<vmem>>, vector<32x256xbf16>
    %cst = arith.constant dense<0.000000e+00> : vector<8x256xf32>
    %3 = tpu.matmul %1, %2, %cst {dimension_numbers = #tpu.dot_dimension_numbers<[1], [0], [0], [1], [0, 0, 1, 1], [], []>} : vector<8x32xbf16>, vector<32x256xbf16>, vector<8x256xf32> -> vector<8x256xf32>
    %4 = arith.truncf %3 : vector<8x256xf32> to vector<8x256xbf16>
    %c0_3 = arith.constant 0 : index
    %c0_4 = arith.constant 0 : index
    %5 = vector.load %arg3[%c0_3, %c0_4] : memref<1x256xf32, #tpu.memory_space<vmem>>, vector<1x256xf32>
    %6 = arith.truncf %5 : vector<1x256xf32> to vector<1x256xbf16>
    %7 = vector.broadcast %6 : vector<1x256xbf16> to vector<8x256xbf16>
    %8 = arith.addf %4, %7 : vector<8x256xbf16>
    %cst_5 = arith.constant 0.000000e+00 : bf16
    %9 = vector.broadcast %cst_5 : bf16 to vector<8x256xbf16>
    %10 = arith.maximumf %8, %9 : vector<8x256xbf16>
    %c0_6 = arith.constant 0 : index
    %c0_7 = arith.constant 0 : index
    %11 = vector.load %arg4[%c0_6, %c0_7] : memref<256x256xbf16, #tpu.memory_space<vmem>>, vector<256x256xbf16>
    %cst_8 = arith.constant dense<0.000000e+00> : vector<8x256xf32>
    %12 = tpu.matmul %10, %11, %cst_8 {dimension_numbers = #tpu.dot_dimension_numbers<[1], [0], [0], [1], [0, 0, 1, 1], [], []>} : vector<8x256xbf16>, vector<256x256xbf16>, vector<8x256xf32> -> vector<8x256xf32>
    %13 = arith.truncf %12 : vector<8x256xf32> to vector<8x256xbf16>
    %c0_9 = arith.constant 0 : index
    %c0_10 = arith.constant 0 : index
    %14 = vector.load %arg5[%c0_9, %c0_10] : memref<1x256xf32, #tpu.memory_space<vmem>>, vector<1x256xf32>
    %15 = arith.truncf %14 : vector<1x256xf32> to vector<1x256xbf16>
    %16 = vector.broadcast %15 : vector<1x256xbf16> to vector<8x256xbf16>
    %17 = arith.addf %13, %16 : vector<8x256xbf16>
    %cst_11 = arith.constant 0.000000e+00 : bf16
    %18 = vector.broadcast %cst_11 : bf16 to vector<8x256xbf16>
    %19 = arith.maximumf %17, %18 : vector<8x256xbf16>
    %c0_12 = arith.constant 0 : index
    %c0_13 = arith.constant 0 : index
    %20 = vector.load %arg6[%c0_12, %c0_13] : memref<1x256xbf16, #tpu.memory_space<vmem>>, vector<1x256xbf16>
    %cst_14 = arith.constant dense<0.000000e+00> : vector<1x8xf32>
    %21 = tpu.matmul %20, %19, %cst_14 {dimension_numbers = #tpu.dot_dimension_numbers<[1], [1], [0], [0], [0, 0, 1, 0], [], []>} : vector<1x256xbf16>, vector<8x256xbf16>, vector<1x8xf32> -> vector<1x8xf32>
    %c0_15 = arith.constant 0 : index
    %c0_16 = arith.constant 0 : index
    %22 = memref.load %arg7[%c0_15, %c0_16] : memref<1x1xf32, #tpu.memory_space<smem>>
    %23 = vector.broadcast %22 : f32 to vector<1x8xf32>
    %24 = arith.addf %21, %23 : vector<1x8xf32>
    %c0_17 = arith.constant 0 : index
    %c0_18 = arith.constant 0 : index
    %25 = vector.load %arg8[%c0_17, %c0_18] : memref<1x8xf32, #tpu.memory_space<vmem>>, vector<1x8xf32>
    tpu.vector_store %arg8[%c0_17, %c0_18], %24 {strides = array<i32>} : memref<1x8xf32, #tpu.memory_space<vmem>>, vector<1x8xf32>,
    return
  }
  func.func @transform_0(%arg0: i32) -> (i32, i32) {
    %c0_i32 = arith.constant 0 : i32
    %c0_i32_0 = arith.constant 0 : i32
    return %arg0, %c0_i32 : i32, i32
  }
  func.func @transform_1(%arg0: i32) -> (i32, i32) {
    %c0_i32 = arith.constant 0 : i32
    %c0_i32_0 = arith.constant 0 : i32
    %c0_i32_1 = arith.constant 0 : i32
    return %c0_i32, %c0_i32_0 : i32, i32
  }
  func.func @transform_2(%arg0: i32) -> (i32, i32) {
    %c0_i32 = arith.constant 0 : i32
    %c0_i32_0 = arith.constant 0 : i32
    %c0_i32_1 = arith.constant 0 : i32
    return %c0_i32, %c0_i32_0 : i32, i32
  }
  func.func @transform_3(%arg0: i32) -> (i32, i32) {
    %c0_i32 = arith.constant 0 : i32
    %c0_i32_0 = arith.constant 0 : i32
    %c0_i32_1 = arith.constant 0 : i32
    return %c0_i32, %c0_i32_0 : i32, i32
  }
  func.func @transform_4(%arg0: i32) -> (i32, i32) {
    %c0_i32 = arith.constant 0 : i32
    %c0_i32_0 = arith.constant 0 : i32
    %c0_i32_1 = arith.constant 0 : i32
    return %c0_i32, %c0_i32_0 : i32, i32
  }
  func.func @transform_5(%arg0: i32) -> (i32, i32) {
    %c0_i32 = arith.constant 0 : i32
    %c0_i32_0 = arith.constant 0 : i32
    %c0_i32_1 = arith.constant 0 : i32
    return %c0_i32, %c0_i32_0 : i32, i32
  }
  func.func @transform_6(%arg0: i32) -> (i32, i32) {
    %c0_i32 = arith.constant 0 : i32
    %c0_i32_0 = arith.constant 0 : i32
    %c0_i32_1 = arith.constant 0 : i32
    return %c0_i32, %c0_i32_0 : i32, i32
  }
  func.func @transform_7(%arg0: i32) -> (i32, i32) {
    %c0_i32 = arith.constant 0 : i32
    %c0_i32_0 = arith.constant 0 : i32
    return %c0_i32, %arg0 : i32, i32
  }
}

</mosaic_0001>

<llo_original>
// kernel: tpu_custom_call.1
$region0: #{tpu_custom_call.1}
  #allocation0 [shape = 'u32[]', space=smem, size = 0x4, offset = 0x4, fixed_abs, tag = 'smem constant byte address 0x4 - core index']
  #allocation1 [shape = 'u32[72,128]{1,0:T(1,128)}', space=vmem, size = 0x9000, scoped, tag = 'internal scratch']
  #allocation2 [shape = 'f32[1,1]{1,0:T(1,128)S(6)}', space=smem, size = 0x200, scoped, tag = 'scoped memory for tpu_custom_call.1']
  %s0 = inlined_call_operand.hbm [shape: f32[8,32], index: 0, kind: input, shape index: {}]
  %s1 = inlined_call_operand.hbm [shape: bf16[32,256], index: 1, kind: input, shape index: {}]
  %s2 = inlined_call_operand.vmem [shape: f32[1,256], index: 2, kind: input, shape index: {}]
  %s3 = inlined_call_operand.hbm [shape: bf16[256,256], index: 3, kind: input, shape index: {}]
  %s4 = inlined_call_operand.vmem [shape: f32[1,256], index: 4, kind: input, shape index: {}]
  %s5 = inlined_call_operand.vmem [shape: bf16[1,256], index: 5, kind: input, shape index: {}]
  %s6 = inlined_call_operand.<no memory space> [shape: f32[1,1], index: 6, kind: input, shape index: {}]
  %s7 = inlined_call_operand.hbm [shape: f32[1,8], index: 7, kind: output, shape index: {}]
  %s8 = sld [smem:[#allocation0]]
  $region50: #{tpu_custom_call.1} parent=0
    _
  %s10 = ssub.s32 1, %s8
  %s11 = scalar_select 0, %s10, %s8
  %12 = sst [smem:[#allocation2]] %s6
  $region1: #{tpu_custom_call.1} parent=0
    #allocation3 [shape = 'u8[4096]{0}', space=vmem, size = 0x1000, scoped, tag = 'input window, operand 0, single buffered']
    #allocation4 [shape = 's32[1]{0}', space=sflag, size = 0x4, scoped, tag = 'scoped memory for tpu_custom_call.1']
    #allocation5 [shape = 's32[1]{0}', space=sflag, size = 0x4, scoped, tag = 'scoped memory for tpu_custom_call.1']
    #allocation6 [shape = 'u8[16384]{0}', space=vmem, size = 0x4000, scoped, tag = 'input window, operand 1, single buffered']
    #allocation7 [shape = 's32[1]{0}', space=sflag, size = 0x4, scoped, tag = 'scoped memory for tpu_custom_call.1']
    #allocation8 [shape = 'u8[131072]{0}', space=vmem, size = 0x20000, scoped, tag = 'input window, operand 3, single buffered']
    #allocation9 [shape = 'u8[512]{0}', space=vmem, size = 0x400, scoped, tag = 'output window, operand 0, single buffered']
    %13 = vsyncpa [#allocation4], 0
    %14 = vsyncpa [#allocation7], 0
    %15 = vsyncpa [#allocation5], 0
    // Predicated region
    $region2: #{tpu_custom_call.1} parent=1 // pred_check
      _
    $region3: #{tpu_custom_call.1} parent=1 // pred_check_branch
      %17 = sbr.rel (0) target = $region5
    $region4: #{tpu_custom_call.1} parent=1 // pred_region
      %19 = vsyncadd [#allocation4], 0
      %s21 = sshll.u32 %s0, 4
      %s22 = int_to_ptr.hbm [resolvable:$true] %s21
      %s23 = sshll.u32 [#allocation3], 4
      %s24 = int_to_ptr.vmem [resolvable:$true] %s23
      %26 = dma.hbm_to_vmem [thread:$0]  %s22, 128, %s24, [#allocation4]
    $region5: #{tpu_custom_call.1} parent=1 // pred_fallthru
      _
    // Predicated region
    $region6: #{tpu_custom_call.1} parent=1 // pred_check
      _
    $region7: #{tpu_custom_call.1} parent=1 // pred_check_branch
      %28 = sbr.rel (0) target = $region9
    $region8: #{tpu_custom_call.1} parent=1 // pred_region
      %30 = vsyncadd [#allocation7], 0
      %s31 = sshll.u32 %s1, 4
      %s32 = int_to_ptr.hbm [resolvable:$true] %s31
      %s33 = sshll.u32 [#allocation6], 4
      %s34 = int_to_ptr.vmem [resolvable:$true] %s33
      %39 = dma.hbm_to_vmem [thread:$0]  %s32, 512, %s34, [#allocation7], 128, 128, 8
    $region9: #{tpu_custom_call.1} parent=1 // pred_fallthru
      _
    // Predicated region
    $region10: #{tpu_custom_call.1} parent=1 // pred_check
      _
    $region11: #{tpu_custom_call.1} parent=1 // pred_check_branch
      %41 = sbr.rel (0) target = $region13
    $region12: #{tpu_custom_call.1} parent=1 // pred_region
      _
    $region13: #{tpu_custom_call.1} parent=1 // pred_fallthru
      _
    // Predicated region
    $region14: #{tpu_custom_call.1} parent=1 // pred_check
      _
    $region15: #{tpu_custom_call.1} parent=1 // pred_check_branch
      %43 = sbr.rel (0) target = $region17
    $region16: #{tpu_custom_call.1} parent=1 // pred_region
      %45 = vsyncadd [#allocation7], 0
      %s46 = sshll.u32 %s3, 4
      %s47 = int_to_ptr.hbm [resolvable:$true] %s46
      %s48 = sshll.u32 [#allocation8], 4
      %s49 = int_to_ptr.vmem [resolvable:$true] %s48
      %54 = dma.hbm_to_vmem [thread:$0]  %s47, 4096, %s49, [#allocation7], 128, 128, 8
    $region17: #{tpu_custom_call.1} parent=1 // pred_fallthru
      _
    // Predicated region
    $region18: #{tpu_custom_call.1} parent=1 // pred_check
      _
    $region19: #{tpu_custom_call.1} parent=1 // pred_check_branch
      %56 = sbr.rel (0) target = $region21
    $region20: #{tpu_custom_call.1} parent=1 // pred_region
      _
    $region21: #{tpu_custom_call.1} parent=1 // pred_fallthru
      _
    // Predicated region
    $region22: #{tpu_custom_call.1} parent=1 // pred_check
      _
    $region23: #{tpu_custom_call.1} parent=1 // pred_check_branch
      %58 = sbr.rel (0) target = $region25
    $region24: #{tpu_custom_call.1} parent=1 // pred_region
      _
    $region25: #{tpu_custom_call.1} parent=1 // pred_fallthru
      _
    // Predicated region
    $region26: #{tpu_custom_call.1} parent=1 // pred_check
      _
    $region27: #{tpu_custom_call.1} parent=1 // pred_check_branch
      %60 = sbr.rel (0) target = $region29
    $region28: #{tpu_custom_call.1} parent=1 // pred_region
      _
    $region29: #{tpu_custom_call.1} parent=1 // pred_fallthru
      _
    // Predicated region
    $region30: #{tpu_custom_call.1} parent=1 // pred_check
      _
    $region31: #{tpu_custom_call.1} parent=1 // pred_check_branch
      %62 = sbr.rel (0) target = $region33
    $region32: #{tpu_custom_call.1} parent=1 // pred_region
      %64 = dma.done [#allocation4], 128
    $region33: #{tpu_custom_call.1} parent=1 // pred_fallthru
      _
    // Predicated region
    $region34: #{tpu_custom_call.1} parent=1 // pred_check
      _
    $region35: #{tpu_custom_call.1} parent=1 // pred_check_branch
      %66 = sbr.rel (0) target = $region37
    $region36: #{tpu_custom_call.1} parent=1 // pred_region
      %68 = dma.done [#allocation7], 512
    $region37: #{tpu_custom_call.1} parent=1 // pred_fallthru
      _
    // Predicated region
    $region38: #{tpu_custom_call.1} parent=1 // pred_check
      _
    $region39: #{tpu_custom_call.1} parent=1 // pred_check_branch
      %70 = sbr.rel (0) target = $region41
    $region40: #{tpu_custom_call.1} parent=1 // pred_region
      %72 = dma.done [#allocation7], 4096
    $region41: #{tpu_custom_call.1} parent=1 // pred_fallthru
      _
    %v74 = vld [vmem:[#allocation3] sm:$0xff]
    %v75 = vpack.c.bf16 %v74, %v74
    %v76 = vld [vmem:[#allocation6] sm:$0xff]
    %v77 = vld [vmem:[#allocation6 + $0x8] sm:$0xff]
    %v78 = vld [vmem:[#allocation6 + $0x10] sm:$0xff]
    %v79 = vld [vmem:[#allocation6 + $0x18] sm:$0xff]
    %v84 = vunpack.c.l.b16 %v76
    %v85 = vunpack.c.h.b16 %v76
    %v86 = vunpack.c.l.b16 %v77
    %v87 = vunpack.c.h.b16 %v77
    %v88 = vunpack.c.l.b16 %v78
    %v89 = vunpack.c.h.b16 %v78
    %v90 = vunpack.c.l.b16 %v79
    %v91 = vunpack.c.h.b16 %v79
    %v92 = vpack.c.b16 %v86, %v84
    %v93 = vpack.c.b16 %v87, %v85
    %v94 = vpack.c.b16 %v90, %v88
    %v95 = vpack.c.b16 %v91, %v89
    %vm100 = vcmask 261120
    %v102 = vsel %vm100, %v75, 0
    %104 = vmatpush.bf16.msra.mxu0 0
    %105 = vmatpush.bf16.msra.mxu0 0
    %106 = vmatpush.bf16.msra.mxu0 0
    %107 = vmatpush.bf16.msra.mxu0 0
    %108 = vmatpush.bf16.msra.mxu0 0
    %109 = vmatpush.bf16.msra.mxu0 0
    %110 = vmatpush.bf16.msra.mxu0 %v94
    %111 = vmatpush.bf16.msra.mxu0 %v92
    %112 = vmatmul.bf16.gmra.mxu0 %v102
    %v113 = vpop.f32.mrf.mxu0
    %v114 = vadd.f32 0.0, %v113
    %v115 = vpop.f32.mrf.mxu0
    %116 = vdwg.mxu0
    %117 = vmatpush.bf16.msra.mxu0 0
    %118 = vmatpush.bf16.msra.mxu0 0
    %119 = vmatpush.bf16.msra.mxu0 0
    %120 = vmatpush.bf16.msra.mxu0 0
    %121 = vmatpush.bf16.msra.mxu0 0
    %122 = vmatpush.bf16.msra.mxu0 0
    %123 = vmatpush.bf16.msra.mxu0 %v95
    %124 = vmatpush.bf16.msra.mxu0 %v93
    %125 = vmatmul.bf16.gmra.mxu0 %v102
    %v126 = vpop.f32.mrf.mxu0
    %v127 = vadd.f32 0.0, %v126
    %v128 = vpop.f32.mrf.mxu0
    %129 = vdwg.mxu0
    %v130 = vpack.c.bf16 %v127, %v114
    %v131 = vld [vmem:[%s2] sm:$0x3]
    %v133 = vperm.slane %v131, 0
    %v134 = vperm.slane %v131, 1
    %v137 = vpack.c.bf16 %v134, %v133
    %v139 = vunpack.c.l.b16 %v137
    %v140 = vunpack.c.h.b16 %v137
    %v141 = vpack.c.b16 %v139, %v139
    %v142 = vpack.c.b16 %v140, %v140
    %v144 = vpack.i.b16 %v141, %v141
    %v146 = vperm.slane %v144, 0
    %v148 = vpack.i.b16 %v142, %v142
    %v150 = vperm.slane %v148, 0
    %v151 = vunpack.c.l.bf16 %v130
    %v152 = vunpack.c.h.bf16 %v130
    %v153 = vunpack.c.l.bf16 %v146
    %v154 = vunpack.c.l.bf16 %v150
    %v155 = vadd.f32 %v151, %v153
    %v156 = vadd.f32 %v152, %v154
    %v157 = vpack.c.bf16 %v156, %v155
    %v158 = vunpack.c.l.bf16 %v157
    %v159 = vunpack.c.h.bf16 %v157
    %v160 = vmax.f32 %v158, 0.0
    %v161 = vmax.f32 %v159, 0.0
    %v162 = vpack.c.bf16 %v160, %v160
    %v163 = vpack.c.bf16 %v161, %v161
    %v164 = vld [vmem:[#allocation8] sm:$0xff]
    %v165 = vld [vmem:[#allocation8 + $0x8] sm:$0xff]
    %v166 = vld [vmem:[#allocation8 + $0x10] sm:$0xff]
    %v167 = vld [vmem:[#allocation8 + $0x18] sm:$0xff]
    %v168 = vld [vmem:[#allocation8 + $0x20] sm:$0xff]
    %v169 = vld [vmem:[#allocation8 + $0x28] sm:$0xff]
    %v170 = vld [vmem:[#allocation8 + $0x30] sm:$0xff]
    %v171 = vld [vmem:[#allocation8 + $0x38] sm:$0xff]
    %v172 = vld [vmem:[#allocation8 + $0x40] sm:$0xff]
    %v173 = vld [vmem:[#allocation8 + $0x48] sm:$0xff]
    %v174 = vld [vmem:[#allocation8 + $0x50] sm:$0xff]
    %v175 = vld [vmem:[#allocation8 + $0x58] sm:$0xff]
    %v176 = vld [vmem:[#allocation8 + $0x60] sm:$0xff]
    %v177 = vld [vmem:[#allocation8 + $0x68] sm:$0xff]
    %v178 = vld [vmem:[#allocation8 + $0x70] sm:$0xff]
    %v179 = vld [vmem:[#allocation8 + $0x78] sm:$0xff]
    %v180 = vld [vmem:[#allocation8 + $0x80] sm:$0xff]
    %v181 = vld [vmem:[#allocation8 + $0x88] sm:$0xff]
    %v182 = vld [vmem:[#allocation8 + $0x90] sm:$0xff]
    %v183 = vld [vmem:[#allocation8 + $0x98] sm:$0xff]
    %v184 = vld [vmem:[#allocation8 + $0xa0] sm:$0xff]
    %v185 = vld [vmem:[#allocation8 + $0xa8] sm:$0xff]
    %v186 = vld [vmem:[#allocation8 + $0xb0] sm:$0xff]
    %v187 = vld [vmem:[#allocation8 + $0xb8] sm:$0xff]
    %v188 = vld [vmem:[#allocation8 + $0xc0] sm:$0xff]
    %v189 = vld [vmem:[#allocation8 + $0xc8] sm:$0xff]
    %v190 = vld [vmem:[#allocation8 + $0xd0] sm:$0xff]
    %v191 = vld [vmem:[#allocation8 + $0xd8] sm:$0xff]
    %v192 = vld [vmem:[#allocation8 + $0xe0] sm:$0xff]
    %v193 = vld [vmem:[#allocation8 + $0xe8] sm:$0xff]
    %v194 = vld [vmem:[#allocation8 + $0xf0] sm:$0xff]
    %v195 = vld [vmem:[#allocation8 + $0xf8] sm:$0xff]
    %v228 = vunpack.c.l.b16 %v164
    %v229 = vunpack.c.h.b16 %v164
    %v230 = vunpack.c.l.b16 %v165
    %v231 = vunpack.c.h.b16 %v165
    %v232 = vunpack.c.l.b16 %v166
    %v233 = vunpack.c.h.b16 %v166
    %v234 = vunpack.c.l.b16 %v167
    %v235 = vunpack.c.h.b16 %v167
    %v236 = vunpack.c.l.b16 %v168
    %v237 = vunpack.c.h.b16 %v168
    %v238 = vunpack.c.l.b16 %v169
    %v239 = vunpack.c.h.b16 %v169
    %v240 = vunpack.c.l.b16 %v170
    %v241 = vunpack.c.h.b16 %v170
    %v242 = vunpack.c.l.b16 %v171
    %v243 = vunpack.c.h.b16 %v171
    %v244 = vunpack.c.l.b16 %v172
    %v245 = vunpack.c.h.b16 %v172
    %v246 = vunpack.c.l.b16 %v173
    %v247 = vunpack.c.h.b16 %v173
    %v248 = vunpack.c.l.b16 %v174
    %v249 = vunpack.c.h.b16 %v174
    %v250 = vunpack.c.l.b16 %v175
    %v251 = vunpack.c.h.b16 %v175
    %v252 = vunpack.c.l.b16 %v176
    %v253 = vunpack.c.h.b16 %v176
    %v254 = vunpack.c.l.b16 %v177
    %v255 = vunpack.c.h.b16 %v177
    %v256 = vunpack.c.l.b16 %v178
    %v257 = vunpack.c.h.b16 %v178
    %v258 = vunpack.c.l.b16 %v179
    %v259 = vunpack.c.h.b16 %v179
    %v260 = vunpack.c.l.b16 %v180
    %v261 = vunpack.c.h.b16 %v180
    %v262 = vunpack.c.l.b16 %v181
    %v263 = vunpack.c.h.b16 %v181
    %v264 = vunpack.c.l.b16 %v182
    %v265 = vunpack.c.h.b16 %v182
    %v266 = vunpack.c.l.b16 %v183
    %v267 = vunpack.c.h.b16 %v183
    %v268 = vunpack.c.l.b16 %v184
    %v269 = vunpack.c.h.b16 %v184
    %v270 = vunpack.c.l.b16 %v185
    %v271 = vunpack.c.h.b16 %v185
    %v272 = vunpack.c.l.b16 %v186
    %v273 = vunpack.c.h.b16 %v186
    %v274 = vunpack.c.l.b16 %v187
    %v275 = vunpack.c.h.b16 %v187
    %v276 = vunpack.c.l.b16 %v188
    %v277 = vunpack.c.h.b16 %v188
    %v278 = vunpack.c.l.b16 %v189
    %v279 = vunpack.c.h.b16 %v189
    %v280 = vunpack.c.l.b16 %v190
    %v281 = vunpack.c.h.b16 %v190
    %v282 = vunpack.c.l.b16 %v191
    %v283 = vunpack.c.h.b16 %v191
    %v284 = vunpack.c.l.b16 %v192
    %v285 = vunpack.c.h.b16 %v192
    %v286 = vunpack.c.l.b16 %v193
    %v287 = vunpack.c.h.b16 %v193
    %v288 = vunpack.c.l.b16 %v194
    %v289 = vunpack.c.h.b16 %v194
    %v290 = vunpack.c.l.b16 %v195
    %v291 = vunpack.c.h.b16 %v195
    %v292 = vpack.c.b16 %v230, %v228
    %v293 = vpack.c.b16 %v231, %v229
    %v294 = vpack.c.b16 %v234, %v232
    %v295 = vpack.c.b16 %v235, %v233
    %v296 = vpack.c.b16 %v238, %v236
    %v297 = vpack.c.b16 %v239, %v237
    %v298 = vpack.c.b16 %v242, %v240
    %v299 = vpack.c.b16 %v243, %v241
    %v300 = vpack.c.b16 %v246, %v244
    %v301 = vpack.c.b16 %v247, %v245
    %v302 = vpack.c.b16 %v250, %v248
    %v303 = vpack.c.b16 %v251, %v249
    %v304 = vpack.c.b16 %v254, %v252
    %v305 = vpack.c.b16 %v255, %v253
    %v306 = vpack.c.b16 %v258, %v256
    %v307 = vpack.c.b16 %v259, %v257
    %v308 = vpack.c.b16 %v262, %v260
    %v309 = vpack.c.b16 %v263, %v261
    %v310 = vpack.c.b16 %v266, %v264
    %v311 = vpack.c.b16 %v267, %v265
    %v312 = vpack.c.b16 %v270, %v268
    %v313 = vpack.c.b16 %v271, %v269
    %v314 = vpack.c.b16 %v274, %v272
    %v315 = vpack.c.b16 %v275, %v273
    %v316 = vpack.c.b16 %v278, %v276
    %v317 = vpack.c.b16 %v279, %v277
    %v318 = vpack.c.b16 %v282, %v280
    %v319 = vpack.c.b16 %v283, %v281
    %v320 = vpack.c.b16 %v286, %v284
    %v321 = vpack.c.b16 %v287, %v285
    %v322 = vpack.c.b16 %v290, %v288
    %v323 = vpack.c.b16 %v291, %v289
    %356 = vmatpush.bf16.msra.mxu0 %v306
    %357 = vmatpush.bf16.msra.mxu0 %v304
    %358 = vmatpush.bf16.msra.mxu0 %v302
    %359 = vmatpush.bf16.msra.mxu0 %v300
    %360 = vmatpush.bf16.msra.mxu0 %v298
    %361 = vmatpush.bf16.msra.mxu0 %v296
    %362 = vmatpush.bf16.msra.mxu0 %v294
    %363 = vmatpush.bf16.msra.mxu0 %v292
    %364 = vmatmul.bf16.gmra.mxu0 %v162
    %v365 = vpop.f32.mrf.mxu0
    %v366 = vadd.f32 0.0, %v365
    %v367 = vpop.f32.mrf.mxu0
    %368 = vdwg.mxu0
    %369 = vmatpush.bf16.msra.mxu0 %v322
    %370 = vmatpush.bf16.msra.mxu0 %v320
    %371 = vmatpush.bf16.msra.mxu0 %v318
    %372 = vmatpush.bf16.msra.mxu0 %v316
    %373 = vmatpush.bf16.msra.mxu0 %v314
    %374 = vmatpush.bf16.msra.mxu0 %v312
    %375 = vmatpush.bf16.msra.mxu0 %v310
    %376 = vmatpush.bf16.msra.mxu0 %v308
    %377 = vmatmul.bf16.gmra.mxu0 %v163
    %v378 = vpop.f32.mrf.mxu0
    %v379 = vadd.f32 %v366, %v378
    %v380 = vpop.f32.mrf.mxu0
    %381 = vdwg.mxu0
    %382 = vmatpush.bf16.msra.mxu0 %v307
    %383 = vmatpush.bf16.msra.mxu0 %v305
    %384 = vmatpush.bf16.msra.mxu0 %v303
    %385 = vmatpush.bf16.msra.mxu0 %v301
    %386 = vmatpush.bf16.msra.mxu0 %v299
    %387 = vmatpush.bf16.msra.mxu0 %v297
    %388 = vmatpush.bf16.msra.mxu0 %v295
    %389 = vmatpush.bf16.msra.mxu0 %v293
    %390 = vmatmul.bf16.gmra.mxu0 %v162
    %v391 = vpop.f32.mrf.mxu0
    %v392 = vadd.f32 0.0, %v391
    %v393 = vpop.f32.mrf.mxu0
    %394 = vdwg.mxu0
    %395 = vmatpush.bf16.msra.mxu0 %v323
    %396 = vmatpush.bf16.msra.mxu0 %v321
    %397 = vmatpush.bf16.msra.mxu0 %v319
    %398 = vmatpush.bf16.msra.mxu0 %v317
    %399 = vmatpush.bf16.msra.mxu0 %v315
    %400 = vmatpush.bf16.msra.mxu0 %v313
    %401 = vmatpush.bf16.msra.mxu0 %v311
    %402 = vmatpush.bf16.msra.mxu0 %v309
    %403 = vmatmul.bf16.gmra.mxu0 %v163
    %v404 = vpop.f32.mrf.mxu0
    %v405 = vadd.f32 %v392, %v404
    %v406 = vpop.f32.mrf.mxu0
    %407 = vdwg.mxu0
    %v408 = vpack.c.bf16 %v405, %v379
    %v409 = vld [vmem:[%s4] sm:$0x3]
    %v411 = vperm.slane %v409, 0
    %v412 = vperm.slane %v409, 1
    %v415 = vpack.c.bf16 %v412, %v411
    %v417 = vunpack.c.l.b16 %v415
    %v418 = vunpack.c.h.b16 %v415
    %v419 = vpack.c.b16 %v417, %v417
    %v420 = vpack.c.b16 %v418, %v418
    %v422 = vpack.i.b16 %v419, %v419
    %v424 = vperm.slane %v422, 0
    %v426 = vpack.i.b16 %v420, %v420
    %v428 = vperm.slane %v426, 0
    %v429 = vunpack.c.l.bf16 %v408
    %v430 = vunpack.c.h.bf16 %v408
    %v431 = vunpack.c.l.bf16 %v424
    %v432 = vunpack.c.l.bf16 %v428
    %v433 = vadd.f32 %v429, %v431
    %v434 = vadd.f32 %v430, %v432
    %v435 = vpack.c.bf16 %v434, %v433
    %v436 = vunpack.c.l.bf16 %v435
    %v437 = vunpack.c.h.bf16 %v435
    %v438 = vmax.f32 %v436, 0.0
    %v439 = vmax.f32 %v437, 0.0
    %v440 = vpack.c.bf16 %v438, %v438
    %v441 = vpack.c.bf16 %v439, %v439
    %v442 = vld [vmem:[%s5] sm:$0x3]
    %s443 = sld [smem:[#allocation2]]
    %v444 = vstv %s443
    %446 = vst [vmem:[#allocation1] ss:$9 sm:$0xff] %v442
    %v447 = vld [vmem:[#allocation1] sm:$0xff]
    %v448 = vld [vmem:[#allocation1 + $0x9] sm:$0xff]
    %451 = vmatpush.bf16.xpose.msra.mxu0 0
    %452 = vmatpush.bf16.xpose.msra.mxu0 0
    %453 = vmatpush.bf16.xpose.msra.mxu0 0
    %454 = vmatpush.bf16.xpose.msra.mxu0 0
    %455 = vmatpush.bf16.xpose.msra.mxu0 0
    %456 = vmatpush.bf16.xpose.msra.mxu0 0
    %457 = vmatpush.bf16.xpose.msra.mxu0 0
    %458 = vmatpush.bf16.xpose.msra.mxu0 %v440
    %459 = vmatmul.bf16.gmra.mxu0 %v447
    %v460 = vpop.f32.mrf.mxu0
    %v461 = vadd.f32 %v444, %v460
    %v462 = vpop.f32.mrf.mxu0
    %463 = vdwg.mxu0
    %464 = vmatpush.bf16.xpose.msra.mxu0 0
    %465 = vmatpush.bf16.xpose.msra.mxu0 0
    %466 = vmatpush.bf16.xpose.msra.mxu0 0
    %467 = vmatpush.bf16.xpose.msra.mxu0 0
    %468 = vmatpush.bf16.xpose.msra.mxu0 0
    %469 = vmatpush.bf16.xpose.msra.mxu0 0
    %470 = vmatpush.bf16.xpose.msra.mxu0 0
    %471 = vmatpush.bf16.xpose.msra.mxu0 %v441
    %472 = vmatmul.bf16.gmra.mxu0 %v448
    %v473 = vpop.f32.mrf.mxu0
    %v474 = vadd.f32 %v461, %v473
    %v475 = vpop.f32.mrf.mxu0
    %476 = vdwg.mxu0
    %vm477 = vcmask 57344
    %478 = vst.msk [vmem:[#allocation9] sm:$0x1] %vm477, %v474
    // Predicated region
    $region42: #{tpu_custom_call.1} parent=1 // pred_check
      _
    $region43: #{tpu_custom_call.1} parent=1 // pred_check_branch
      %480 = sbr.rel (0) target = $region45
    $region44: #{tpu_custom_call.1} parent=1 // pred_region
      %482 = vsyncadd [#allocation5], 0
      %s484 = sshll.u32 [#allocation9], 4
      %s485 = int_to_ptr.vmem [resolvable:$true] %s484
      %s486 = sshll.u32 %s7, 4
      %s487 = int_to_ptr.hbm [resolvable:$true] %s486
      %489 = dma.vmem_to_hbm [thread:$0]  %s485, 16, %s487, [#allocation5]
    $region45: #{tpu_custom_call.1} parent=1 // pred_fallthru
      _
    // Predicated region
    $region46: #{tpu_custom_call.1} parent=1 // pred_check
      _
    $region47: #{tpu_custom_call.1} parent=1 // pred_check_branch
      %491 = sbr.rel (0) target = $region49
    $region48: #{tpu_custom_call.1} parent=1 // pred_region
      %493 = dma.done [#allocation5], 16
    $region49: #{tpu_custom_call.1} parent=1 // pred_fallthru
      _
    %494 = vsyncpa [#allocation4], 1
    %495 = vsyncpa [#allocation7], 1
    %496 = vsyncpa [#allocation5], 1

</llo_original>
